<compile_context>
chip_gen: v7x
topology: tpu7x:2x2x1
jax: 0.10.0
libtpu: 0.0.40
codegen_flags: <defaults>
</compile_context>

<pallas_src>
import functools

import jax
import jax.numpy as jnp
import numpy as np
from jax.experimental import pallas as pl
from jax.experimental.pallas import tpu as pltpu


# ----------------------------- Pallas kernels ------------------------------

def _blockmask_kernel(u_ref, bm_ref, cnt_ref, *, H, W, bs, gamma):
    """Per-batch-element block mask + partial count.

    u_ref  : (H, W)   uniform(0,1) samples
    bm_ref : (H, W)   output block mask (1 = keep, 0 = drop)
    cnt_ref: (1, 128) output partial count (scalar broadcast over lanes)
    """
    p = bs // 2
    # Bernoulli seeds, fused in-kernel (gamma is a compile-time constant).
    m = (u_ref[...] < gamma).astype(jnp.float32)                    # (H, W)

    # Banded window-membership matrices, built from iota (no HBM traffic).
    # Window of output index j is [j - p, j + bs - 1 - p]; this reproduces
    # max_pool2d(pad=bs//2) followed by the reference's [:-1, :-1] trim for
    # even block sizes.
    kw = jax.lax.broadcasted_iota(jnp.int32, (W, W), 0)              # input col
    jw = jax.lax.broadcasted_iota(jnp.int32, (W, W), 1)              # output col
    Bw = ((kw >= jw - p) & (kw <= jw + (bs - 1 - p))).astype(jnp.float32)
    ih = jax.lax.broadcasted_iota(jnp.int32, (H, H), 0)              # output row
    lh = jax.lax.broadcasted_iota(jnp.int32, (H, H), 1)              # input row
    Bh = ((lh >= ih - p) & (lh <= ih + (bs - 1 - p))).astype(jnp.float32)

    # count[i, j] = number of dropped seeds inside the bs x bs window centred
    # (asymmetrically for even bs) at (i, j). Exact in f32 (0/1 operands), so
    # count > 0  <=>  stride-1 max pool of the mask is 1. Two tiny MXU matmuls
    # replace the bs^2-1 shift+max VALU chain and handle borders implicitly.
    count = jnp.dot(Bh, jnp.dot(m, Bw, preferred_element_type=jnp.float32),
                    preferred_element_type=jnp.float32)              # (H, W)
    bm = jnp.where(count > 0.0, 0.0, 1.0)                            # keep mask

    bm_ref[...] = bm
    cnt_ref[...] = jnp.full((1, 128), jnp.sum(bm), dtype=jnp.float32)


def _apply_kernel(scale_ref, x_ref, bm_ref, o_ref):
    """out = x * (block_mask * scale), mask broadcast over channels.

    scale_ref: (1, 1)    in SMEM
    x_ref    : (TC, HW)  input tile, model dtype
    bm_ref   : (1, HW)   block mask (f32)
    o_ref    : (TC, HW)  output tile, model dtype
    """
    # Pre-scale the mask once per tile (HW muls) instead of per element.
    bm_s = bm_ref[...] * scale_ref[0, 0]                             # (1, HW)
    xf = x_ref[...].astype(jnp.float32)                              # f32 vregs
    o_ref[...] = (xf * bm_s).astype(o_ref.dtype)


# ------------------------------ JAX wrapper ---------------------------------

def _pick_channel_tile(C, HW, itemsize, budget_bytes=2 << 20):
    """Largest channel tile that divides C, keeps a tile under ~budget_bytes
    (so double-buffered x/out tiles fit v5e/v7x scoped VMEM), and keeps the
    sublane dim aligned unless the tile spans all of C."""
    if C * HW * itemsize <= budget_bytes:
        return C
    sub = max(1, 32 // max(itemsize, 1))          # 8 for f32, 16 for bf16
    cands = [d for d in range(1, C + 1)
             if C % d == 0 and d % sub == 0 and d * HW * itemsize <= budget_bytes]
    return max(cands) if cands else C


def dropblock2d_forward(x, u, drop_prob, block_size, training=True):
    """DropBlock2D forward. x: (N, C, H, W); u: uniform(0,1) samples (N, H, W)."""
    if (not training) or drop_prob == 0.0:
        return x

    N, C, H, W = x.shape
    HW = H * W
    gamma = float(drop_prob) / float(block_size ** 2)

    # ---- pass 1: block mask + per-batch counts (grid over N, parallel) ----
    bm, counts = pl.pallas_call(
        functools.partial(_blockmask_kernel, H=H, W=W, bs=block_size, gamma=gamma),
        grid=(N,),
        in_specs=[pl.BlockSpec((None, H, W), lambda n: (n, 0, 0))],
        out_specs=(pl.BlockSpec((None, H, W), lambda n: (n, 0, 0)),
                   pl.BlockSpec((None, 1, 128), lambda n: (n, 0, 0))),
        out_shape=(jax.ShapeDtypeStruct((N, H, W), jnp.float32),
                   jax.ShapeDtypeStruct((N, 1, 128), jnp.float32)),
        compiler_params=pltpu.CompilerParams(
            dimension_semantics=("parallel",)),
    )(u)

    # ---- glue: global normalization factor (N scalars -> 1 scalar) ----
    total = jnp.sum(counts[:, 0, 0])
    numel = jnp.asarray(N * HW, jnp.float32)
    # Guard: if every position is dropped the reference produces inf/NaN;
    # here the (all-zero) output is simply left unscaled.
    scale = jnp.where(total > 0.0, numel / total, jnp.float32(0.0)).reshape(1, 1)

    # ---- pass 2: lane-dense apply pass (grid over N x C-tiles, parallel) ----
    # Mask reshape to (N, 1, HW) is a free XLA bitcast on a tiny array; the
    # heavy pass below streams x/out lane-dense (last dim HW, multiple of 128).
    x3 = x.reshape(N, C, HW)
    bm3 = bm.reshape(N, 1, HW)
    tc = _pick_channel_tile(C, HW, x.dtype.itemsize)
    out3 = pl.pallas_call(
        _apply_kernel,
        grid=(N, C // tc),
        in_specs=[pl.BlockSpec(memory_space=pltpu.MemorySpace.SMEM),
                  pl.BlockSpec((None, tc, HW), lambda n, c: (n, c, 0)),
                  pl.BlockSpec((None, 1, HW), lambda n, c: (n, 0, 0))],
        out_specs=pl.BlockSpec((None, tc, HW), lambda n, c: (n, c, 0)),
        out_shape=jax.ShapeDtypeStruct((N, C, HW), x.dtype),
        compiler_params=pltpu.CompilerParams(
            dimension_semantics=("parallel", "parallel"),
            vmem_limit_bytes=32 * 1024 * 1024),
    )(scale, x3, bm3)
    return out3.reshape(N, C, H, W)


# --------------------------- pure-JAX reference ------------------------------

def reference_dropblock(x, u, drop_prob, block_size):
    x = x.astype(jnp.float32)
    gamma = drop_prob / (block_size ** 2)
    mask = (u < gamma).astype(jnp.float32)                    # (N, H, W)
    p = block_size // 2
    pooled = jax.lax.reduce_window(
        mask, -jnp.inf, jax.lax.max,
        window_dimensions=(1, block_size, block_size),
        window_strides=(1, 1, 1),
        padding=((0, 0), (p, p), (p, p)))
    if block_size % 2 == 0:
        pooled = pooled[:, :-1, :-1]
    block_mask = 1.0 - pooled
    out = x * block_mask[:, None, :, :]
    out = out * block_mask.size / jnp.sum(block_mask)
    return out


# --------------------------------- main --------------------------------------

if __name__ == "__main__":
    key = jax.random.PRNGKey(0)
    kx, ku = jax.random.split(key)

    N, C, H, W = 2, 4, 16, 16
    x = jax.random.normal(kx, (N, C, H, W), jnp.float32)
    u = jax.random.uniform(ku, (N, H, W), jnp.float32)

    # Case 1: odd block size (3), drop_prob = 0.25
    y1 = jax.block_until_ready(dropblock2d_forward(x, u, 0.25, 3))
    r1 = reference_dropblock(x, u, 0.25, 3)
    assert y1.shape == (N, C, H, W) and y1.dtype == x.dtype
    np.testing.assert_allclose(np.asarray(y1), np.asarray(r1),
                               rtol=1e-5, atol=1e-5)

    # Case 2: even block size (4), drop_prob = 0.3 (exercises the implicit
    # [:-1, :-1] trim reproduced by the asymmetric window)
    y2 = jax.block_until_ready(dropblock2d_forward(x, u, 0.3, 4))
    r2 = reference_dropblock(x, u, 0.3, 4)
    np.testing.assert_allclose(np.asarray(y2), np.asarray(r2),
                               rtol=1e-5, atol=1e-5)

    # Case 3: bf16 input stays bf16 end-to-end (halved HBM traffic in pass 2)
    xb = x.astype(jnp.bfloat16)
    yb = jax.block_until_ready(dropblock2d_forward(xb, u, 0.25, 3))
    assert yb.dtype == jnp.bfloat16
    rb = reference_dropblock(xb, u, 0.25, 3)
    np.testing.assert_allclose(np.asarray(yb.astype(jnp.float32)),
                               np.asarray(rb), rtol=2e-2, atol=2e-2)

    # Case 4: eval mode / zero drop prob -> identity
    y3 = jax.block_until_ready(
        dropblock2d_forward(x, u, 0.25, 3, training=False))
    np.testing.assert_allclose(np.asarray(y3), np.asarray(x))
    y4 = jax.block_until_ready(dropblock2d_forward(x, u, 0.0, 3))
    np.testing.assert_allclose(np.asarray(y4), np.asarray(x))

    print("KERNEL_OK")
</pallas_src>

<mosaic_0001>
module attributes {stable_mosaic.version = 11 : i64} {
  func.func @_blockmask_kernel(%arg0: i32, %arg1: memref<1x16x16xf32, #tpu.memory_space<vmem>>, %arg2: memref<1x16x16xf32, #tpu.memory_space<vmem>>, %arg3: memref<1x1x128xf32, #tpu.memory_space<vmem>>) attributes {dimension_semantics = [#tpu.dimension_semantics<parallel>], iteration_bounds = array<i64: 2>, scalar_prefetch = 0 : i64, scratch_operands = 0 : i64, tpu.core_type = #tpu.core_type<tc>, window_params = [{transform_indices = @transform_0, window_bounds = array<i64: 1, 16, 16>}, {transform_indices = @transform_1, window_bounds = array<i64: 1, 16, 16>}, {transform_indices = @transform_2, window_bounds = array<i64: 1, 1, 128>}]} {
    %c0 = arith.constant 0 : index
    %c0_0 = arith.constant 0 : index
    %c0_1 = arith.constant 0 : index
    %0 = vector.load %arg1[%c0, %c0_0, %c0_1] : memref<1x16x16xf32, #tpu.memory_space<vmem>>, vector<1x16x16xf32>
    %1 = vector.shape_cast %0 : vector<1x16x16xf32> to vector<16x16xf32>
    %cst = arith.constant 0.027777778 : f32
    %2 = vector.broadcast %cst : f32 to vector<16x16xf32>
    %3 = arith.cmpf olt, %1, %2 : vector<16x16xf32>
    %4 = arith.extui %3 : vector<16x16xi1> to vector<16x16xi32>
    %5 = arith.sitofp %4 : vector<16x16xi32> to vector<16x16xf32>
    %6 = tpu.iota {dimensions = array<i32: 0>} : vector<16x16xi32>
    %7 = tpu.iota {dimensions = array<i32: 1>} : vector<16x16xi32>
    %c1_i32 = arith.constant 1 : i32
    %8 = vector.broadcast %c1_i32 : i32 to vector<16x16xi32>
    %9 = arith.subi %7, %8 : vector<16x16xi32>
    %10 = arith.cmpi sge, %6, %9 : vector<16x16xi32>
    %c1_i32_2 = arith.constant 1 : i32
    %11 = vector.broadcast %c1_i32_2 : i32 to vector<16x16xi32>
    %12 = arith.addi %7, %11 : vector<16x16xi32>
    %13 = arith.cmpi sle, %6, %12 : vector<16x16xi32>
    %14 = arith.andi %10, %13 : vector<16x16xi1>
    %15 = arith.extui %14 : vector<16x16xi1> to vector<16x16xi32>
    %16 = arith.sitofp %15 : vector<16x16xi32> to vector<16x16xf32>
    %17 = tpu.iota {dimensions = array<i32: 0>} : vector<16x16xi32>
    %18 = tpu.iota {dimensions = array<i32: 1>} : vector<16x16xi32>
    %c1_i32_3 = arith.constant 1 : i32
    %19 = vector.broadcast %c1_i32_3 : i32 to vector<16x16xi32>
    %20 = arith.subi %17, %19 : vector<16x16xi32>
    %21 = arith.cmpi sge, %18, %20 : vector<16x16xi32>
    %c1_i32_4 = arith.constant 1 : i32
    %22 = vector.broadcast %c1_i32_4 : i32 to vector<16x16xi32>
    %23 = arith.addi %17, %22 : vector<16x16xi32>
    %24 = arith.cmpi sle, %18, %23 : vector<16x16xi32>
    %25 = arith.andi %21, %24 : vector<16x16xi1>
    %26 = arith.extui %25 : vector<16x16xi1> to vector<16x16xi32>
    %27 = arith.sitofp %26 : vector<16x16xi32> to vector<16x16xf32>
    %cst_5 = arith.constant dense<0.000000e+00> : vector<16x16xf32>
    %28 = tpu.matmul %5, %16, %cst_5 {dimension_numbers = #tpu.dot_dimension_numbers<[1], [0], [0], [1], [0, 0, 1, 1], [], []>} : vector<16x16xf32>, vector<16x16xf32>, vector<16x16xf32> -> vector<16x16xf32>
    %cst_6 = arith.constant dense<0.000000e+00> : vector<16x16xf32>
    %29 = tpu.matmul %27, %28, %cst_6 {dimension_numbers = #tpu.dot_dimension_numbers<[1], [0], [0], [1], [0, 0, 1, 1], [], []>} : vector<16x16xf32>, vector<16x16xf32>, vector<16x16xf32> -> vector<16x16xf32>
    %cst_7 = arith.constant 0.000000e+00 : f32
    %30 = vector.broadcast %cst_7 : f32 to vector<16x16xf32>
    %31 = arith.cmpf ogt, %29, %30 : vector<16x16xf32>
    %cst_8 = arith.constant 0.000000e+00 : f32
    %cst_9 = arith.constant 1.000000e+00 : f32
    %32 = vector.broadcast %cst_8 : f32 to vector<16x16xf32>
    %33 = vector.broadcast %cst_9 : f32 to vector<16x16xf32>
    %34 = arith.select %31, %32, %33 : vector<16x16xi1>, vector<16x16xf32>
    %c0_10 = arith.constant 0 : index
    %c0_11 = arith.constant 0 : index
    %c0_12 = arith.constant 0 : index
    %35 = vector.load %arg2[%c0_10, %c0_11, %c0_12] : memref<1x16x16xf32, #tpu.memory_space<vmem>>, vector<1x16x16xf32>
    %36 = vector.shape_cast %35 : vector<1x16x16xf32> to vector<16x16xf32>
    %37 = vector.shape_cast %34 : vector<16x16xf32> to vector<1x16x16xf32>
    tpu.vector_store %arg2[%c0_10, %c0_11, %c0_12], %37 {strides = array<i32>} : memref<1x16x16xf32, #tpu.memory_space<vmem>>, vector<1x16x16xf32>,
    %38 = vector.shape_cast %34 : vector<16x16xf32> to vector<1x16x16xf32>
    %cst_13 = arith.constant dense<0.000000e+00> : vector<1xf32>
    %39 = vector.multi_reduction <add>, %38, %cst_13 [1, 2] : vector<1x16x16xf32> to vector<1xf32>
    %40 = vector.shape_cast %39 : vector<1xf32> to vector<1x1x1xf32>
    %41 = vector.extract %40[0, 0, 0] : f32 from vector<1x1x1xf32>
    %42 = vector.broadcast %41 : f32 to vector<1x128xf32>
    %c0_14 = arith.constant 0 : index
    %c0_15 = arith.constant 0 : index
    %c0_16 = arith.constant 0 : index
    %43 = vector.load %arg3[%c0_14, %c0_15, %c0_16] : memref<1x1x128xf32, #tpu.memory_space<vmem>>, vector<1x1x128xf32>
    %44 = vector.shape_cast %43 : vector<1x1x128xf32> to vector<1x128xf32>
    %45 = vector.shape_cast %42 : vector<1x128xf32> to vector<1x1x128xf32>
    tpu.vector_store %arg3[%c0_14, %c0_15, %c0_16], %45 {strides = array<i32>} : memref<1x1x128xf32, #tpu.memory_space<vmem>>, vector<1x1x128xf32>,
    return
  }
  func.func @transform_0(%arg0: i32) -> (i32, i32, i32) {
    %c0_i32 = arith.constant 0 : i32
    %c0_i32_0 = arith.constant 0 : i32
    %c0_i32_1 = arith.constant 0 : i32
    return %arg0, %c0_i32, %c0_i32_0 : i32, i32, i32
  }
  func.func @transform_1(%arg0: i32) -> (i32, i32, i32) {
    %c0_i32 = arith.constant 0 : i32
    %c0_i32_0 = arith.constant 0 : i32
    %c0_i32_1 = arith.constant 0 : i32
    return %arg0, %c0_i32, %c0_i32_0 : i32, i32, i32
  }
  func.func @transform_2(%arg0: i32) -> (i32, i32, i32) {
    %c0_i32 = arith.constant 0 : i32
    %c0_i32_0 = arith.constant 0 : i32
    %c0_i32_1 = arith.constant 0 : i32
    return %arg0, %c0_i32, %c0_i32_0 : i32, i32, i32
  }
}

</mosaic_0001>

<llo_original>
// kernel: tpu_custom_call.1
$region0: #{tpu_custom_call.1}
  #allocation0 [shape = 'u32[]', space=smem, size = 0x4, offset = 0x4, fixed_abs, tag = 'smem constant byte address 0x4 - core index']
  #allocation1 [shape = 'u32[144,128]{1,0:T(1,128)}', space=vmem, size = 0x12000, scoped, tag = 'internal scratch']
  %s0 = inlined_call_operand.hbm [shape: f32[2,16,16], index: 0, kind: input, shape index: {}]
  %s1 = inlined_call_operand.hbm [shape: f32[2,16,16], index: 1, kind: output, shape index: {0}]
  %s2 = inlined_call_operand.hbm [shape: f32[2,1,128], index: 2, kind: output, shape index: {1}]
  %3 = xla_tuple %s1, %s2
  %s4 = sld [smem:[#allocation0]]
  $region49: #{tpu_custom_call.1} parent=0
    _
  %s6 = ssub.s32 1, %s4
  %s7 = scalar_select 0, %s6, %s4
  $region1: #{tpu_custom_call.1} parent=0
    #allocation2 [shape = 'u8[16384]{0}', space=vmem, size = 0x4000, scoped, tag = 'input window, operand 0']
    #allocation3 [shape = 's32[2]{0}', space=sflag, size = 0x8, scoped, tag = 'scoped memory for tpu_custom_call.1']
    #allocation4 [shape = 's32[2]{0}', space=sflag, size = 0x8, scoped, tag = 'scoped memory for tpu_custom_call.1']
    #allocation5 [shape = 'u8[16384]{0}', space=vmem, size = 0x4000, scoped, tag = 'output window, operand 0']
    #allocation6 [shape = 'u8[1024]{0}', space=vmem, size = 0x400, scoped, tag = 'output window, operand 1']
    #allocation7 [shape = 's32[2]{0}', space=sflag, size = 0x8, scoped, tag = 'scoped memory for tpu_custom_call.1']
    %8 = vsyncpa [#allocation3], 0
    %s9 = scalar_lea.sflag [#allocation3], 1
    %10 = vsyncpa %s9, 0
    %11 = vsyncpa [#allocation4], 0
    %s12 = scalar_lea.sflag [#allocation4], 1
    %13 = vsyncpa %s12, 0
    %14 = vsyncpa [#allocation7], 0
    %s15 = scalar_lea.sflag [#allocation7], 1
    %16 = vsyncpa %s15, 0
    loop: start=0, step=1, limit=4
    $region2: #{tpu_custom_call.1} parent=1 // loop_pre_header
      _
    $region3: #{tpu_custom_call.1} parent=1 // loop_header
      %s18 = sphi 0, %s22
      %p19 = scmp.ge.s32.totalorder %s18, 4
      %s28 = sphi 0, %s30
      %s31 = sphi 0, %s28
      %s32 = sphi 0, %s31
      %s48 = sphi 0, %s32
      %s54 = sphi 0, %s56
      %s57 = sphi 0, %s54
      %s58 = sphi 0, %s57
      %s74 = sphi 0, %s58
      %s80 = sphi 0, %s82
      %s83 = sphi 0, %s80
      %s84 = sphi 0, %s83
      %s100 = sphi 0, %s84
    $region4: #{tpu_custom_call.1} parent=1 // loop_header_branch
      %21 = sbr.rel (%p19) target = $region8
    $region5: #{tpu_custom_call.1} parent=1 // loop_body
      %s23 = ssub.s32 %s18, 1
      %s24 = ssub.s32 %s18, 2
      %s25 = sadd.s32 %s18, 1
      %s26 = ssub.s32 %s18, %s25
      %p27 = scmp.eq.s32.totalorder %s26, 0
      %s29 = sadd.s32 %s28, 1
      %s30 = scalar_select %p27, %s28, %s29
      %p33 = pneg %p27
      %p34 = scmp.eq.s32.totalorder %s18, 1
      %p35 = por %p33, %p34
      %p36 = scmp.ne.s32.totalorder %s28, %s31
      %p37 = scmp.eq.s32.totalorder %s18, 0
      %p38 = por %p36, %p37
      %p39 = scmp.ne.s32.totalorder %s28, %s31
      %p40 = scmp.eq.s32.totalorder %s23, 1
      %p41 = por %p39, %p40
      %p42 = scmp.ne.s32.totalorder %s31, %s32
      %p43 = scmp.eq.s32.totalorder %s23, 0
      %p44 = por %p42, %p43
      %p45 = scmp.ne.s32.totalorder %s31, %s32
      %p46 = scmp.eq.s32.totalorder %s24, 1
      %p47 = por %p45, %p46
      %p49 = scmp.ne.s32.totalorder %s32, %s48
      %p50 = scmp.eq.s32.totalorder %s24, 0
      %p51 = por %p49, %p50
      %s52 = ssub.s32 %s18, %s25
      %p53 = scmp.eq.s32.totalorder %s52, 0
      %s55 = sadd.s32 %s54, 1
      %s56 = scalar_select %p53, %s54, %s55
      %p59 = pneg %p53
      %p60 = scmp.eq.s32.totalorder %s18, 1
      %p61 = por %p59, %p60
      %p62 = scmp.ne.s32.totalorder %s54, %s57
      %p63 = scmp.eq.s32.totalorder %s18, 0
      %p64 = por %p62, %p63
      %p65 = scmp.ne.s32.totalorder %s54, %s57
      %p66 = scmp.eq.s32.totalorder %s23, 1
      %p67 = por %p65, %p66
      %p68 = scmp.ne.s32.totalorder %s57, %s58
      %p69 = scmp.eq.s32.totalorder %s23, 0
      %p70 = por %p68, %p69
      %p71 = scmp.ne.s32.totalorder %s57, %s58
      %p72 = scmp.eq.s32.totalorder %s24, 1
      %p73 = por %p71, %p72
      %p75 = scmp.ne.s32.totalorder %s58, %s74
      %p76 = scmp.eq.s32.totalorder %s24, 0
      %p77 = por %p75, %p76
      %s78 = ssub.s32 %s18, %s25
      %p79 = scmp.eq.s32.totalorder %s78, 0
      %s81 = sadd.s32 %s80, 1
      %s82 = scalar_select %p79, %s80, %s81
      %p85 = pneg %p79
      %p86 = scmp.eq.s32.totalorder %s18, 1
      %p87 = por %p85, %p86
      %p88 = scmp.ne.s32.totalorder %s80, %s83
      %p89 = scmp.eq.s32.totalorder %s18, 0
      %p90 = por %p88, %p89
      %p91 = scmp.ne.s32.totalorder %s80, %s83
      %p92 = scmp.eq.s32.totalorder %s23, 1
      %p93 = por %p91, %p92
      %p94 = scmp.ne.s32.totalorder %s83, %s84
      %p95 = scmp.eq.s32.totalorder %s23, 0
      %p96 = por %p94, %p95
      %p97 = scmp.ne.s32.totalorder %s83, %s84
      %p98 = scmp.eq.s32.totalorder %s24, 1
      %p99 = por %p97, %p98
      %p101 = scmp.ne.s32.totalorder %s84, %s100
      %p102 = scmp.eq.s32.totalorder %s24, 0
      %p103 = por %p101, %p102
      %p104 = scmp.le.s32.totalorder 1, %s18
      %p105 = scmp.lt.s32.totalorder %s18, 3
      %p106 = pnand %p104, %p105
      %p107 = pneg %p106
      // Predicated region
      $region9: #{tpu_custom_call.1} parent=5 // pred_check
        _
      $region10: #{tpu_custom_call.1} parent=5 // pred_check_branch
        %109 = sbr.rel (%p106) target = $region12
      $region11: #{tpu_custom_call.1} parent=5 // pred_region
        %s110 = ssub.s32 %s18, 1
      $region12: #{tpu_custom_call.1} parent=5 // pred_fallthru
        _
      %p111 = scmp.lt.s32.totalorder %s18, 2
      // Predicated region
      $region13: #{tpu_custom_call.1} parent=5 // pred_check
        %p112 = pneg %p111
      $region14: #{tpu_custom_call.1} parent=5 // pred_check_branch
        %114 = sbr.rel (%p112) target = $region16
      $region15: #{tpu_custom_call.1} parent=5 // pred_region
        // Predicated region
        $region17: #{tpu_custom_call.1} parent=15 // pred_check
          %p115 = pneg %p38
        $region18: #{tpu_custom_call.1} parent=15 // pred_check_branch
          %117 = sbr.rel (%p115) target = $region20
        $region19: #{tpu_custom_call.1} parent=15 // pred_region
          %s118 = sand.u32 %s28, 1
          %s119 = scalar_lea.sflag [#allocation3], %s118
          %s120 = sand.u32 %s28, 1
          %s121 = smul.addr %s120, 16
          %s122 = scalar_lea.vmem [#allocation2], %s121
          %s124 = ssub.s32 256, 256
          %125 = vsyncadd %s119, %s124
          %s126 = smul.addr %s18, 2
          %s127 = smul.addr %s126, 128
          %s128 = scalar_lea.hbm %s0, %s127
          %s129 = sshll.u32 %s122, 4
          %s130 = int_to_ptr.vmem [resolvable:$true] %s129
          %135 = dma.hbm_to_vmem [thread:$0]  %s128, 256, %s130, %s119, 128, 128, 8
        $region20: #{tpu_custom_call.1} parent=15 // pred_fallthru
          _
      $region16: #{tpu_custom_call.1} parent=5 // pred_fallthru
        _
      %p136 = scmp.le.s32.totalorder 1, %s18
      %p137 = scmp.lt.s32.totalorder %s18, 3
      %p138 = pnand %p136, %p137
      %p139 = pneg %p138
      // Predicated region
      $region21: #{tpu_custom_call.1} parent=5 // pred_check
        _
      $region22: #{tpu_custom_call.1} parent=5 // pred_check_branch
        %141 = sbr.rel (%p138) target = $region24
      $region23: #{tpu_custom_call.1} parent=5 // pred_region
        %s142 = ssub.s32 %s18, 1
        %s143 = sand.u32 %s31, 1
        %s144 = scalar_lea.sflag [#allocation3], %s143
        %s145 = sand.u32 %s31, 1
        %s146 = smul.addr %s145, 16
        %s147 = scalar_lea.vmem [#allocation2], %s146
        // Predicated region
        $region25: #{tpu_custom_call.1} parent=23 // pred_check
          %p148 = pneg %p44
        $region26: #{tpu_custom_call.1} parent=23 // pred_check_branch
          %150 = sbr.rel (%p148) target = $region28
        $region27: #{tpu_custom_call.1} parent=23 // pred_region
          %151 = dma.done %s144, 256
        $region28: #{tpu_custom_call.1} parent=23 // pred_fallthru
          _
        %s152 = sand.u32 %s31, 1
        %s153 = scalar_lea.sflag [#allocation3], %s152
        %s154 = sand.u32 %s31, 1
        %s155 = smul.addr %s154, 16
        %s156 = scalar_lea.vmem [#allocation2], %s155
        %p157 = pneg %p44
        %p158 = pneg %p41
        %p159 = pneg %p70
        %p160 = pneg %p67
        %s161 = sand.u32 %s57, 1
        %s162 = scalar_lea.sflag [#allocation4], %s161
        %s163 = sand.u32 %s57, 1
        %s164 = smul.addr %s163, 16
        %s165 = scalar_lea.vmem [#allocation5], %s164
        %p166 = pneg %p96
        %p167 = pneg %p93
        %s168 = sand.u32 %s83, 1
        %s169 = scalar_lea.sflag [#allocation7], %s168
        %s170 = sand.u32 %s83, 1
        %s171 = scalar_lea.vmem [#allocation6], %s170
        %v172 = vld [vmem:[%s147] sm:$0xff]
        %v173 = vld [vmem:[%s147 + $0x8] sm:$0xff]
        %vm174 = vcmp.lt.f32.partialorder %v172, 0.027777778
        %vm175 = vcmp.lt.f32.partialorder %v173, 0.027777778
        %v176 = vsel %vm174, 1, 0
        %v177 = vsel %vm175, 1, 0
        %v178 = vcvt.s32.f32 %v176
        %v179 = vcvt.s32.f32 %v177
        %v180 = vlaneseq
        %v181 = vshrl.u32 %v180, 7
        %v182 = vadd.s32 %v181, 8
        %v183 = vlaneseq
        %v184 = vand.u32 %v183, 127
        %v185 = vsub.s32 %v184, 1
        %vm186 = vcmp.ge.s32.totalorder %v181, %v185
        %vm187 = vcmp.ge.s32.totalorder %v182, %v185
        %v188 = vadd.s32 %v184, 1
        %vm189 = vcmp.le.s32.totalorder %v181, %v188
        %vm190 = vcmp.le.s32.totalorder %v182, %v188
        %vm191 = vmand %vm186, %vm189
        %vm192 = vmand %vm187, %vm190
        %v193 = vsel %vm191, 1, 0
        %v194 = vsel %vm192, 1, 0
        %v195 = vcvt.s32.f32 %v193
        %v196 = vcvt.s32.f32 %v194
        %v197 = vsub.s32 %v181, 1
        %v198 = vsub.s32 %v182, 1
        %vm199 = vcmp.ge.s32.totalorder %v184, %v197
        %vm200 = vcmp.ge.s32.totalorder %v184, %v198
        %v201 = vadd.s32 %v181, 1
        %v202 = vadd.s32 %v182, 1
        %vm203 = vcmp.le.s32.totalorder %v184, %v201
        %vm204 = vcmp.le.s32.totalorder %v184, %v202
        %vm205 = vmand %vm199, %vm203
        %vm206 = vmand %vm200, %vm204
        %v207 = vsel %vm205, 1, 0
        %v208 = vsel %vm206, 1, 0
        %v209 = vcvt.s32.f32 %v207
        %v210 = vcvt.s32.f32 %v208
        %vm211 = vcmask 130048
        %v213 = vsel %vm211, %v178, 0
        %v216 = vsel %vm211, %v179, 0
        %218 = vmatprep.subr.mxu0 0.0
        %219 = vmatpush1.msra.mxu0 %v195
        %220 = vmatprep.subr.mxu0 0.0
        %221 = vmatpush1.msra.mxu0 %v196
        %222 = vmatprep.subr.mxu0 0.0
        %223 = vmatpush1.msra.mxu0 0.0
        %224 = vmatprep.subr.mxu0 0.0
        %225 = vmatpush1.msra.mxu0 0.0
        %226 = vmatprep.subr.mxu0 0.0
        %227 = vmatpush1.msra.mxu0 0.0
        %228 = vmatprep.subr.mxu0 0.0
        %229 = vmatpush1.msra.mxu0 0.0
        %230 = vmatprep.subr.mxu0 0.0
        %231 = vmatpush1.msra.mxu0 0.0
        %232 = vmatprep.subr.mxu0 0.0
        %233 = vmatpush1.msra.mxu0 0.0
        %234 = vmatprep.subr.mxu0 0.0
        %235 = vmatpush1.msra.mxu0 0.0
        %236 = vmatprep.subr.mxu0 0.0
        %237 = vmatpush1.msra.mxu0 0.0
        %238 = vmatprep.subr.mxu0 0.0
        %239 = vmatpush1.msra.mxu0 0.0
        %240 = vmatprep.subr.mxu0 0.0
        %241 = vmatpush1.msra.mxu0 0.0
        %242 = vmatprep.subr.mxu0 0.0
        %243 = vmatpush1.msra.mxu0 0.0
        %244 = vmatprep.subr.mxu0 0.0
        %245 = vmatpush1.msra.mxu0 0.0
        %246 = vmatprep.subr.mxu0 0.0
        %247 = vmatpush1.msra.mxu0 0.0
        %248 = vmatprep.subr.mxu0 0.0
        %249 = vmatpush1.msra.mxu0 0.0
        %250 = vmatprep.subr.mxu0 0.0
        %251 = vmatpush1.msra.mxu0 0.0
        %252 = vmatprep.subr.mxu0 0.0
        %253 = vmatpush1.msra.mxu0 0.0
        %254 = vmatprep.subr.mxu0 0.0
        %255 = vmatpush1.msra.mxu0 0.0
        %256 = vmatprep.subr.mxu0 0.0
        %257 = vmatpush1.msra.mxu0 0.0
        %258 = vmatprep.subr.mxu0 0.0
        %259 = vmatpush1.msra.mxu0 0.0
        %260 = vmatprep.subr.mxu0 0.0
        %261 = vmatpush1.msra.mxu0 0.0
        %262 = vmatprep.subr.mxu0 0.0
        %263 = vmatpush1.msra.mxu0 0.0
        %264 = vmatprep.subr.mxu0 0.0
        %265 = vmatpush1.msra.mxu0 0.0
        %266 = vmatprep.subr.mxu0 0.0
        %267 = vmatpush1.msra.mxu0 0.0
        %268 = vmatprep.subr.mxu0 0.0
        %269 = vmatpush1.msra.mxu0 0.0
        %270 = vmatprep.subr.mxu0 0.0
        %271 = vmatpush1.msra.mxu0 0.0
        %272 = vmatprep.subr.mxu0 0.0
        %273 = vmatpush1.msra.mxu0 0.0
        %274 = vmatprep.subr.mxu0 0.0
        %275 = vmatpush1.msra.mxu0 0.0
        %276 = vmatprep.subr.mxu0 0.0
        %277 = vmatpush1.msra.mxu0 0.0
        %278 = vmatprep.subr.mxu0 0.0
        %279 = vmatpush1.msra.mxu0 0.0
        %280 = vmatprep.subr.mxu0 0.0
        %281 = vmatpush1.msra.mxu0 0.0
        %282 = vmatprep.mubr.f32.mxu0 0.0
        %283 = vmatmul.mubr.f32.gmra.mrb[0].mxu0 %v213
        %v284 = vpop.f32.mrb[0].mxu0
        %v285 = vadd.f32 0.0, %v284
        %v286 = vpop.f32.mrb[0].mxu0
        %287 = vmatprep.mubr.f32.mxu0 0.0
        %288 = vmatmul.mubr.f32.gmra.mrb[0].mxu0 %v216
        %v289 = vpop.f32.mrb[0].mxu0
        %v290 = vadd.f32 0.0, %v289
        %v291 = vpop.f32.mrb[0].mxu0
        %292 = vdwg.mxu0
        %v294 = vsel %vm211, %v209, 0
        %v297 = vsel %vm211, %v210, 0
        %299 = vmatprep.subr.mxu0 0.0
        %300 = vmatpush1.msra.mxu0 %v285
        %301 = vmatprep.subr.mxu0 0.0
        %302 = vmatpush1.msra.mxu0 %v290
        %303 = vmatprep.subr.mxu0 0.0
        %304 = vmatpush1.msra.mxu0 0.0
        %305 = vmatprep.subr.mxu0 0.0
        %306 = vmatpush1.msra.mxu0 0.0
        %307 = vmatprep.subr.mxu0 0.0
        %308 = vmatpush1.msra.mxu0 0.0
        %309 = vmatprep.subr.mxu0 0.0
        %310 = vmatpush1.msra.mxu0 0.0
        %311 = vmatprep.subr.mxu0 0.0
        %312 = vmatpush1.msra.mxu0 0.0
        %313 = vmatprep.subr.mxu0 0.0
        %314 = vmatpush1.msra.mxu0 0.0
        %315 = vmatprep.subr.mxu0 0.0
        %316 = vmatpush1.msra.mxu0 0.0
        %317 = vmatprep.subr.mxu0 0.0
        %318 = vmatpush1.msra.mxu0 0.0
        %319 = vmatprep.subr.mxu0 0.0
        %320 = vmatpush1.msra.mxu0 0.0
        %321 = vmatprep.subr.mxu0 0.0
        %322 = vmatpush1.msra.mxu0 0.0
        %323 = vmatprep.subr.mxu0 0.0
        %324 = vmatpush1.msra.mxu0 0.0
        %325 = vmatprep.subr.mxu0 0.0
        %326 = vmatpush1.msra.mxu0 0.0
        %327 = vmatprep.subr.mxu0 0.0
        %328 = vmatpush1.msra.mxu0 0.0
        %329 = vmatprep.subr.mxu0 0.0
        %330 = vmatpush1.msra.mxu0 0.0
        %331 = vmatprep.subr.mxu0 0.0
        %332 = vmatpush1.msra.mxu0 0.0
        %333 = vmatprep.subr.mxu0 0.0
        %334 = vmatpush1.msra.mxu0 0.0
        %335 = vmatprep.subr.mxu0 0.0
        %336 = vmatpush1.msra.mxu0 0.0
        %337 = vmatprep.subr.mxu0 0.0
        %338 = vmatpush1.msra.mxu0 0.0
        %339 = vmatprep.subr.mxu0 0.0
        %340 = vmatpush1.msra.mxu0 0.0
        %341 = vmatprep.subr.mxu0 0.0
        %342 = vmatpush1.msra.mxu0 0.0
        %343 = vmatprep.subr.mxu0 0.0
        %344 = vmatpush1.msra.mxu0 0.0
        %345 = vmatprep.subr.mxu0 0.0
        %346 = vmatpush1.msra.mxu0 0.0
        %347 = vmatprep.subr.mxu0 0.0
        %348 = vmatpush1.msra.mxu0 0.0
        %349 = vmatprep.subr.mxu0 0.0
        %350 = vmatpush1.msra.mxu0 0.0
        %351 = vmatprep.subr.mxu0 0.0
        %352 = vmatpush1.msra.mxu0 0.0
        %353 = vmatprep.subr.mxu0 0.0
        %354 = vmatpush1.msra.mxu0 0.0
        %355 = vmatprep.subr.mxu0 0.0
        %356 = vmatpush1.msra.mxu0 0.0
        %357 = vmatprep.subr.mxu0 0.0
        %358 = vmatpush1.msra.mxu0 0.0
        %359 = vmatprep.subr.mxu0 0.0
        %360 = vmatpush1.msra.mxu0 0.0
        %361 = vmatprep.subr.mxu0 0.0
        %362 = vmatpush1.msra.mxu0 0.0
        %363 = vmatprep.mubr.f32.mxu0 0.0
        %364 = vmatmul.mubr.f32.gmra.mrb[0].mxu0 %v294
        %v365 = vpop.f32.mrb[0].mxu0
        %v366 = vadd.f32 0.0, %v365
        %v367 = vpop.f32.mrb[0].mxu0
        %368 = vmatprep.mubr.f32.mxu0 0.0
        %369 = vmatmul.mubr.f32.gmra.mrb[0].mxu0 %v297
        %v370 = vpop.f32.mrb[0].mxu0
        %v371 = vadd.f32 0.0, %v370
        %v372 = vpop.f32.mrb[0].mxu0
        %373 = vdwg.mxu0
        %vm374 = vcmp.gt.f32.partialorder %v366, 0.0
        %vm375 = vcmp.gt.f32.partialorder %v371, 0.0
        %v376 = vsel %vm374, 0.0, 1.0
        %v377 = vsel %vm375, 0.0, 1.0
        %378 = vst.msk [vmem:[%s165] sm:$0xff] %vm211, %v376
        %379 = vst.msk [vmem:[%s165 + $0x8] sm:$0xff] %vm211, %v377
        %v380 = vsel %vm211, %v376, 0.0
        %v381 = vsel %vm211, %v377, 0.0
        %v382 = vadd.f32 %v380, %v381
        %383 = vadd.xlane.f32.xlu0 %v382
        %v384 = vpop.xlane.xlu0 %383
        %v385 = vrot.slane %v384, 4
        %v386 = vadd.f32 %v384, %v385
        %v387 = vrot.slane %v386, 2
        %v388 = vadd.f32 %v386, %v387
        %v389 = vrot.slane %v388, 1
        %v390 = vadd.f32 %v388, %v389
        %s391 = vtos %v390
        %v392 = vstv %s391
        %393 = vst [vmem:[%s171] sm:$0x1] %v392
        %s394 = sand.u32 %s57, 1
        %s395 = scalar_lea.sflag [#allocation4], %s394
        %s396 = sand.u32 %s57, 1
        %s397 = smul.addr %s396, 16
        %s398 = scalar_lea.vmem [#allocation5], %s397
        %s399 = sand.u32 %s83, 1
        %s400 = scalar_lea.sflag [#allocation7], %s399
        %s401 = sand.u32 %s83, 1
        %s402 = scalar_lea.vmem [#allocation6], %s401
        // Predicated region
        $region29: #{tpu_custom_call.1} parent=23 // pred_check
          %p403 = pneg %p67
        $region30: #{tpu_custom_call.1} parent=23 // pred_check_branch
          %405 = sbr.rel (%p403) target = $region32
        $region31: #{tpu_custom_call.1} parent=23 // pred_region
          %s407 = ssub.s32 256, 256
          %408 = vsyncadd %s395, %s407
          %s409 = smul.addr %s23, 2
          %s410 = smul.addr %s409, 128
          %s411 = scalar_lea.hbm %s1, %s410
          %s412 = sshll.u32 %s398, 4
          %s413 = int_to_ptr.vmem [resolvable:$true] %s412
          %418 = dma.vmem_to_hbm [thread:$0]  %s413, 256, %s411, %s395, 128, 128, 8
        $region32: #{tpu_custom_call.1} parent=23 // pred_fallthru
          _
        // Predicated region
        $region33: #{tpu_custom_call.1} parent=23 // pred_check
          %p419 = pneg %p93
        $region34: #{tpu_custom_call.1} parent=23 // pred_check_branch
          %421 = sbr.rel (%p419) target = $region36
        $region35: #{tpu_custom_call.1} parent=23 // pred_region
          %s423 = ssub.s32 16, 16
          %424 = vsyncadd %s400, %s423
          %s425 = smul.addr %s23, 16
          %s426 = scalar_lea.hbm %s2, %s425
          %s428 = sshll.u32 %s402, 4
          %s429 = int_to_ptr.vmem [resolvable:$true] %s428
          %431 = dma.vmem_to_hbm [thread:$0]  %s429, 16, %s426, %s400
        $region36: #{tpu_custom_call.1} parent=23 // pred_fallthru
          _
      $region24: #{tpu_custom_call.1} parent=5 // pred_fallthru
        _
      %p432 = scmp.le.s32.totalorder 2, %s18
      // Predicated region
      $region37: #{tpu_custom_call.1} parent=5 // pred_check
        %p433 = pneg %p432
      $region38: #{tpu_custom_call.1} parent=5 // pred_check_branch
        %435 = sbr.rel (%p433) target = $region40
      $region39: #{tpu_custom_call.1} parent=5 // pred_region
        %s436 = ssub.s32 %s18, 2
        // Predicated region
        $region41: #{tpu_custom_call.1} parent=39 // pred_check
          %p437 = pneg %p73
        $region42: #{tpu_custom_call.1} parent=39 // pred_check_branch
          %439 = sbr.rel (%p437) target = $region44
        $region43: #{tpu_custom_call.1} parent=39 // pred_region
          %s440 = sand.u32 %s58, 1
          %s441 = scalar_lea.sflag [#allocation4], %s440
          %s442 = sand.u32 %s58, 1
          %s443 = smul.addr %s442, 16
          %s444 = scalar_lea.vmem [#allocation5], %s443
          %445 = dma.done %s441, 256
        $region44: #{tpu_custom_call.1} parent=39 // pred_fallthru
          _
        // Predicated region
        $region45: #{tpu_custom_call.1} parent=39 // pred_check
          %p446 = pneg %p99
        $region46: #{tpu_custom_call.1} parent=39 // pred_check_branch
          %448 = sbr.rel (%p446) target = $region48
        $region47: #{tpu_custom_call.1} parent=39 // pred_region
          %s449 = sand.u32 %s84, 1
          %s450 = scalar_lea.sflag [#allocation7], %s449
          %s451 = sand.u32 %s84, 1
          %s452 = scalar_lea.vmem [#allocation6], %s451
          %453 = dma.done %s450, 16
        $region48: #{tpu_custom_call.1} parent=39 // pred_fallthru
          _
      $region40: #{tpu_custom_call.1} parent=5 // pred_fallthru
        _
    $region6: #{tpu_custom_call.1} parent=1 // loop_footer
      %s22 = sadd.s32 1, %s18
    $region7: #{tpu_custom_call.1} parent=1 // loop_footer_branch
      %17 = sbr.rel target = $region3
    $region8: #{tpu_custom_call.1} parent=1 // loop_exit
      _
    %454 = vsyncpa [#allocation3], 1
    %s455 = scalar_lea.sflag [#allocation3], 1
    %456 = vsyncpa %s455, 1
    %457 = vsyncpa [#allocation4], 1
    %s458 = scalar_lea.sflag [#allocation4], 1
    %459 = vsyncpa %s458, 1
    %460 = vsyncpa [#allocation7], 1
    %s461 = scalar_lea.sflag [#allocation7], 1
    %462 = vsyncpa %s461, 1

</llo_original>
